<compile_context>
chip_gen: v7x
topology: tpu7x:2x2x1
jax: 0.10.0
libtpu: 0.0.40
codegen_flags: <defaults>
</compile_context>

<pallas_src>
import functools

import jax
import jax.numpy as jnp
from jax.experimental import pallas as pl
from jax.experimental.pallas import tpu as pltpu

_LANE = 128


def _round_up(x, m):
    return ((x + m - 1) // m) * m


def generator_kernel(x_ref, attn_ref, ids_ref, wall_ref, ball_ref, out_ref,
                     *, inv_temp, v_pad, vext_pad, bb, t):
    """One batch-block (bb batches, rows = bb*t flattened decoder steps) per step.

    x_ref    : (rows, D)            f32   flattened (batch*time, d_model)
    attn_ref : (bb, t, S)           f32
    ids_ref  : (B, S)               i32   full table (sliced per block in-kernel)
    wall_ref : (D, Vp + 128)        f32   [W_proj | w_pgen | 0-pad]
    ball_ref : (1, Vp + 128)        f32   [b_proj | -1e30 pad | b_pgen | 0-pad]
    out_ref  : (rows, Vext_pad)     f32
    """
    rows = bb * t
    s = attn_ref.shape[-1]

    # ---- fused projection + p_gen: one MXU pass over all rows of the block ----
    full = jnp.dot(x_ref[...], wall_ref[...],
                   preferred_element_type=jnp.float32) + ball_ref[...]
    logits = full[:, :v_pad]                                # [rows, Vp]
    alpha = jax.nn.sigmoid(full[:, v_pad:v_pad + 1])        # [rows, 1]

    # ---- vocab softmax (lane-dense over Vp; padded cols carry -1e30 bias) -----
    z = logits * inv_temp
    z = z - jnp.max(z, axis=-1, keepdims=True)
    ez = jnp.exp(z)
    vocab_dist_ = (alpha * ez) * pl.reciprocal(
        jnp.sum(ez, axis=-1, keepdims=True), approx=True)   # [rows, Vp]

    # ---- attention softmax (per-batch, 3-D block) ------------------------------
    a = attn_ref[...] * inv_temp                            # [bb, t, S]
    a = a - jnp.max(a, axis=-1, keepdims=True)
    ea = jnp.exp(a)
    attn_sm = ea * pl.reciprocal(jnp.sum(ea, axis=-1, keepdims=True), approx=True)

    # ---- exact scatter_add via lane-dense one-hot batched matmul (MXU) ---------
    b0 = pl.multiple_of(pl.program_id(0) * bb, bb)
    ids = ids_ref[pl.ds(b0, bb), :]                         # [bb, S] i32
    vid = jax.lax.broadcasted_iota(jnp.int32, (bb, s, vext_pad), 2)
    one_hot = (vid == ids[:, :, None]).astype(jnp.float32)  # [bb, S, Vext_pad]
    scattered = jnp.einsum('bts,bsv->btv', attn_sm, one_hot,
                           preferred_element_type=jnp.float32)
    scattered = scattered.reshape(rows, vext_pad)           # collapse leading dims

    # ---- combine and emit one full-block lane-dense store ----------------------
    pad_cols = vext_pad - v_pad
    if pad_cols > 0:
        vfull = jnp.concatenate(
            [vocab_dist_, jnp.zeros((rows, pad_cols), jnp.float32)], axis=1)
    else:
        vfull = vocab_dist_
    out_ref[...] = jnp.log(vfull + (1.0 - alpha) * scattered + 1e-18)


def generator_forward(x, attn_dist, enc_batch_extend_vocab, max_oov_length,
                      params, temp=1.0):
    B, T, D = x.shape
    S = attn_dist.shape[-1]
    V = params["w_proj"].shape[1]

    # 128-aligned padded sizes (keeps every tile and store lane-dense).
    V_pad = _round_up(V, _LANE)
    Vext = V + max_oov_length
    Vext_pad = _round_up(V_pad + max_oov_length, _LANE)
    PG = _LANE  # extra 128-wide column block carrying the p_gen column

    # Pack W_proj (zero-padded to V_pad) and w_pgen into one matrix so a single
    # MXU pass yields both the vocab logits and the p_gen logit.
    w_all = jnp.zeros((D, V_pad + PG), jnp.float32)
    w_all = w_all.at[:, :V].set(params["w_proj"])
    w_all = w_all.at[:, V_pad].set(params["w_pgen"][:, 0])
    b_all = jnp.zeros((1, V_pad + PG), jnp.float32)
    b_all = b_all.at[:, :V].set(params["b_proj"])
    if V_pad > V:
        b_all = b_all.at[:, V:V_pad].set(-1e30)  # mask padded vocab cols → softmax 0
    b_all = b_all.at[:, V_pad].set(params["b_pgen"][0, 0])

    # Shift OOV ids into the padded extended-vocab layout.
    ids = enc_batch_extend_vocab.astype(jnp.int32)
    ids = jnp.where(ids >= V, ids + (V_pad - V), ids)

    # Batch-block size: feed the MXU ~128 rows per grid step when possible.
    BB = min(B, max(1, _LANE // T))
    while B % BB != 0:
        BB -= 1
    if (BB * T) % 8 != 0 and BB != B:
        BB = B  # keep the sublane dim 8-aligned or equal to the full extent
    rows = BB * T
    grid = (B // BB,)

    x2 = x.reshape(B * T, D)  # merge batch into the matmul M dimension

    kernel = functools.partial(generator_kernel, inv_temp=1.0 / float(temp),
                               v_pad=V_pad, vext_pad=Vext_pad, bb=BB, t=T)

    out_p = pl.pallas_call(
        kernel,
        out_shape=jax.ShapeDtypeStruct((B * T, Vext_pad), jnp.float32),
        grid_spec=pltpu.PrefetchScalarGridSpec(
            num_scalar_prefetch=0,
            grid=grid,
            in_specs=[
                pl.BlockSpec((rows, D), lambda i: (i, 0)),           # x (flattened)
                pl.BlockSpec((BB, T, S), lambda i: (i, 0, 0)),       # attn_dist
                pl.BlockSpec((B, S), lambda i: (0, 0)),              # enc ids (full)
                pl.BlockSpec((D, V_pad + PG), lambda i: (0, 0)),     # packed weights
                pl.BlockSpec((1, V_pad + PG), lambda i: (0, 0)),     # packed bias
            ],
            out_specs=pl.BlockSpec((rows, Vext_pad), lambda i: (i, 0)),
        ),
        compiler_params=pltpu.CompilerParams(
            dimension_semantics=("parallel",),       # batch blocks are independent
            vmem_limit_bytes=32 * 1024 * 1024),
    )(x2, attn_dist, ids, w_all, b_all)

    out_p = out_p.reshape(B, T, Vext_pad)
    if V_pad == V and Vext_pad == Vext:
        return out_p
    if max_oov_length > 0:
        return jnp.concatenate(
            [out_p[:, :, :V], out_p[:, :, V_pad:V_pad + max_oov_length]], axis=2)
    return out_p[:, :, :V]


def generator_reference(x, attn_dist, enc_ids, max_oov_length, params, temp=1.0):
    """Pure-JAX reference mirroring the PyTorch pointer-gen forward."""
    logit = x @ params["w_proj"] + params["b_proj"][0]
    p_gen = x @ params["w_pgen"] + params["b_pgen"][0]
    alpha = jax.nn.sigmoid(p_gen)
    vocab_dist_ = alpha * jax.nn.softmax(logit / temp, axis=2)
    attn_ = (1.0 - alpha) * jax.nn.softmax(attn_dist / temp, axis=-1)
    B, T, V = logit.shape
    ext = jnp.concatenate(
        [vocab_dist_, jnp.zeros((B, T, max_oov_length), jnp.float32)], axis=2)

    def scat(vd, idx, att):          # vd [T, Vext], idx [S], att [T, S]
        return vd.at[:, idx].add(att)

    out = jax.vmap(scat)(ext, enc_ids, attn_)
    return jnp.log(out + 1e-18)


if __name__ == "__main__":
    # Small shapes consistent with the module: d_model = hidden_dim = 32.
    B, T, D = 2, 8, 32          # batch, decoder steps, d_model
    V, S = 128, 16              # vocab, source length
    MAX_OOV = 16                # extra OOV slots

    key = jax.random.PRNGKey(0)
    kx, ka, ke, kw1, kb1, kw2, kb2 = jax.random.split(key, 7)

    x = jax.random.normal(kx, (B, T, D), dtype=jnp.float32)
    attn_dist = jax.random.normal(ka, (B, T, S), dtype=jnp.float32)
    enc_batch_extend_vocab = jax.random.randint(ke, (B, S), 0, V + MAX_OOV,
                                                dtype=jnp.int32)

    params = {
        # proj: Linear(d_model, vocab)  (stored transposed: [D, V])
        "w_proj": 0.05 * jax.random.normal(kw1, (D, V), dtype=jnp.float32),
        "b_proj": 0.05 * jax.random.normal(kb1, (1, V), dtype=jnp.float32),
        # p_gen_linear: Linear(hidden_dim, 1)
        "w_pgen": 0.05 * jax.random.normal(kw2, (D, 1), dtype=jnp.float32),
        "b_pgen": 0.05 * jax.random.normal(kb2, (1, 1), dtype=jnp.float32),
    }

    out = generator_forward(x, attn_dist, enc_batch_extend_vocab, MAX_OOV,
                            params, temp=1.0)
    out = jax.block_until_ready(out)

    ref = generator_reference(x, attn_dist, enc_batch_extend_vocab, MAX_OOV,
                              params, temp=1.0)
    assert out.shape == (B, T, V + MAX_OOV)
    # Slightly looser tolerance than the pure-f32 reference because the kernel
    # uses the EUP approximate reciprocal for the softmax denominators.
    assert jnp.allclose(out, ref, rtol=2e-3, atol=2e-3), "mismatch vs reference"

    print("KERNEL_OK")
</pallas_src>

<mosaic_0001>
module attributes {stable_mosaic.version = 11 : i64} {
  func.func @generator_kernel(%arg0: i32, %arg1: memref<16x32xf32, #tpu.memory_space<vmem>>, %arg2: memref<2x8x16xf32, #tpu.memory_space<vmem>>, %arg3: memref<2x16xi32, #tpu.memory_space<vmem>>, %arg4: memref<32x256xf32, #tpu.memory_space<vmem>>, %arg5: memref<1x256xf32, #tpu.memory_space<vmem>>, %arg6: memref<16x256xf32, #tpu.memory_space<vmem>>) attributes {dimension_semantics = [#tpu.dimension_semantics<parallel>], iteration_bounds = array<i64: 1>, scalar_prefetch = 0 : i64, scratch_operands = 0 : i64, tpu.core_type = #tpu.core_type<tc>, window_params = [{transform_indices = @transform_0, window_bounds = array<i64: 16, 32>}, {transform_indices = @transform_1, window_bounds = array<i64: 2, 8, 16>}, {pipeline_mode = #tpu.pipeline_mode<synchronous>, transform_indices = @transform_2, window_bounds = array<i64: 2, 16>}, {pipeline_mode = #tpu.pipeline_mode<synchronous>, transform_indices = @transform_3, window_bounds = array<i64: 32, 256>}, {pipeline_mode = #tpu.pipeline_mode<synchronous>, transform_indices = @transform_4, window_bounds = array<i64: 1, 256>}, {transform_indices = @transform_5, window_bounds = array<i64: 16, 256>}]} {
    %c0 = arith.constant 0 : index
    %c0_0 = arith.constant 0 : index
    %0 = vector.load %arg1[%c0, %c0_0] : memref<16x32xf32, #tpu.memory_space<vmem>>, vector<16x32xf32>
    %c0_1 = arith.constant 0 : index
    %c0_2 = arith.constant 0 : index
    %1 = vector.load %arg4[%c0_1, %c0_2] : memref<32x256xf32, #tpu.memory_space<vmem>>, vector<32x256xf32>
    %cst = arith.constant dense<0.000000e+00> : vector<16x256xf32>
    %2 = tpu.matmul %0, %1, %cst {dimension_numbers = #tpu.dot_dimension_numbers<[1], [0], [0], [1], [0, 0, 1, 1], [], []>} : vector<16x32xf32>, vector<32x256xf32>, vector<16x256xf32> -> vector<16x256xf32>
    %c0_3 = arith.constant 0 : index
    %c0_4 = arith.constant 0 : index
    %3 = vector.load %arg5[%c0_3, %c0_4] : memref<1x256xf32, #tpu.memory_space<vmem>>, vector<1x256xf32>
    %4 = vector.broadcast %3 : vector<1x256xf32> to vector<16x256xf32>
    %5 = arith.addf %2, %4 : vector<16x256xf32>
    %6 = vector.extract_strided_slice %5 {offsets = [0, 0], sizes = [16, 128], strides = [1, 1]} : vector<16x256xf32> to vector<16x128xf32>
    %7 = vector.extract_strided_slice %5 {offsets = [0, 128], sizes = [16, 1], strides = [1, 1]} : vector<16x256xf32> to vector<16x1xf32>
    %8 = arith.negf %7 : vector<16x1xf32>
    %9 = math.exp %8 : vector<16x1xf32>
    %cst_5 = arith.constant 1.000000e+00 : f32
    %10 = vector.broadcast %cst_5 : f32 to vector<16x1xf32>
    %11 = arith.addf %10, %9 : vector<16x1xf32>
    %12 = arith.divf %10, %11 : vector<16x1xf32>
    %cst_6 = arith.constant 1.000000e+00 : f32
    %13 = vector.broadcast %cst_6 : f32 to vector<16x128xf32>
    %14 = arith.mulf %6, %13 : vector<16x128xf32>
    %cst_7 = arith.constant dense<0xFF800000> : vector<16xf32>
    %15 = vector.multi_reduction <maximumf>, %14, %cst_7 [1] : vector<16x128xf32> to vector<16xf32>
    %16 = vector.shape_cast %15 : vector<16xf32> to vector<16x1xf32>
    %17 = vector.broadcast %16 : vector<16x1xf32> to vector<16x128xf32>
    %18 = arith.subf %14, %17 : vector<16x128xf32>
    %19 = math.exp %18 : vector<16x128xf32>
    %20 = vector.broadcast %12 : vector<16x1xf32> to vector<16x128xf32>
    %21 = arith.mulf %20, %19 : vector<16x128xf32>
    %cst_8 = arith.constant dense<0.000000e+00> : vector<16xf32>
    %22 = vector.multi_reduction <add>, %19, %cst_8 [1] : vector<16x128xf32> to vector<16xf32>
    %23 = vector.shape_cast %22 : vector<16xf32> to vector<16x1xf32>
    %24 = tpu.reciprocal %23 {approx = true} : vector<16x1xf32> -> vector<16x1xf32>
    %25 = vector.broadcast %24 : vector<16x1xf32> to vector<16x128xf32>
    %26 = arith.mulf %21, %25 : vector<16x128xf32>
    %c0_9 = arith.constant 0 : index
    %c0_10 = arith.constant 0 : index
    %c0_11 = arith.constant 0 : index
    %27 = vector.load %arg2[%c0_9, %c0_10, %c0_11] : memref<2x8x16xf32, #tpu.memory_space<vmem>>, vector<2x8x16xf32>
    %cst_12 = arith.constant 1.000000e+00 : f32
    %28 = vector.broadcast %cst_12 : f32 to vector<2x8x16xf32>
    %29 = arith.mulf %27, %28 : vector<2x8x16xf32>
    %cst_13 = arith.constant dense<0xFF800000> : vector<2x8xf32>
    %30 = vector.multi_reduction <maximumf>, %29, %cst_13 [2] : vector<2x8x16xf32> to vector<2x8xf32>
    %31 = vector.shape_cast %30 : vector<2x8xf32> to vector<2x8x1xf32>
    %32 = vector.broadcast %31 : vector<2x8x1xf32> to vector<2x8x16xf32>
    %33 = arith.subf %29, %32 : vector<2x8x16xf32>
    %34 = math.exp %33 : vector<2x8x16xf32>
    %cst_14 = arith.constant dense<0.000000e+00> : vector<2x8xf32>
    %35 = vector.multi_reduction <add>, %34, %cst_14 [2] : vector<2x8x16xf32> to vector<2x8xf32>
    %36 = vector.shape_cast %35 : vector<2x8xf32> to vector<2x8x1xf32>
    %37 = tpu.reciprocal %36 {approx = true} : vector<2x8x1xf32> -> vector<2x8x1xf32>
    %38 = vector.broadcast %37 : vector<2x8x1xf32> to vector<2x8x16xf32>
    %39 = arith.mulf %34, %38 : vector<2x8x16xf32>
    %c2_i32 = arith.constant 2 : i32
    %40 = arith.muli %arg0, %c2_i32 : i32
    %41 = tpu.assume_multiple %40, 2 : i32
    %42 = arith.index_cast %41 : i32 to index
    %c0_15 = arith.constant 0 : index
    %43 = vector.load %arg3[%42, %c0_15] : memref<2x16xi32, #tpu.memory_space<vmem>>, vector<2x16xi32>
    %44 = tpu.iota {dimensions = array<i32: 2>} : vector<2x16x256xi32>
    %45 = vector.shape_cast %43 : vector<2x16xi32> to vector<2x16x1xi32>
    %46 = vector.broadcast %45 : vector<2x16x1xi32> to vector<2x16x256xi32>
    %47 = arith.cmpi eq, %44, %46 : vector<2x16x256xi32>
    %48 = arith.extui %47 : vector<2x16x256xi1> to vector<2x16x256xi32>
    %49 = arith.sitofp %48 : vector<2x16x256xi32> to vector<2x16x256xf32>
    "tpu.trace_start"() <{level = 10 : i32, message = "bts,bsv->btv"}> : () -> ()
    %cst_16 = arith.constant dense<0.000000e+00> : vector<2x8x256xf32>
    %50 = tpu.matmul %39, %49, %cst_16 {dimension_numbers = #tpu.dot_dimension_numbers<[2], [1], [1], [2], [0, 0, 0, 1, 1, 2], [0], [0]>} : vector<2x8x16xf32>, vector<2x16x256xf32>, vector<2x8x256xf32> -> vector<2x8x256xf32>
    "tpu.trace_stop"() : () -> ()
    %51 = vector.shape_cast %50 : vector<2x8x256xf32> to vector<16x256xf32>
    %cst_17 = arith.constant 0.000000e+00 : f32
    %52 = vector.broadcast %cst_17 : f32 to vector<16x128xf32>
    %53 = tpu.concatenate %26, %52 in 1 : vector<16x128xf32>, vector<16x128xf32> -> vector<16x256xf32>
    %cst_18 = arith.constant 1.000000e+00 : f32
    %54 = vector.broadcast %cst_18 : f32 to vector<16x1xf32>
    %55 = arith.subf %54, %12 : vector<16x1xf32>
    %56 = vector.broadcast %55 : vector<16x1xf32> to vector<16x256xf32>
    %57 = arith.mulf %56, %51 : vector<16x256xf32>
    %58 = arith.addf %53, %57 : vector<16x256xf32>
    %cst_19 = arith.constant 1.000000e-18 : f32
    %59 = vector.broadcast %cst_19 : f32 to vector<16x256xf32>
    %60 = arith.addf %58, %59 : vector<16x256xf32>
    %61 = math.log %60 : vector<16x256xf32>
    %c0_20 = arith.constant 0 : index
    %c0_21 = arith.constant 0 : index
    %62 = vector.load %arg6[%c0_20, %c0_21] : memref<16x256xf32, #tpu.memory_space<vmem>>, vector<16x256xf32>
    tpu.vector_store %arg6[%c0_20, %c0_21], %61 {strides = array<i32>} : memref<16x256xf32, #tpu.memory_space<vmem>>, vector<16x256xf32>,
    return
  }
  func.func @transform_0(%arg0: i32) -> (i32, i32) {
    %c0_i32 = arith.constant 0 : i32
    %c0_i32_0 = arith.constant 0 : i32
    return %arg0, %c0_i32 : i32, i32
  }
  func.func @transform_1(%arg0: i32) -> (i32, i32, i32) {
    %c0_i32 = arith.constant 0 : i32
    %c0_i32_0 = arith.constant 0 : i32
    %c0_i32_1 = arith.constant 0 : i32
    return %arg0, %c0_i32, %c0_i32_0 : i32, i32, i32
  }
  func.func @transform_2(%arg0: i32) -> (i32, i32) {
    %c0_i32 = arith.constant 0 : i32
    %c0_i32_0 = arith.constant 0 : i32
    %c0_i32_1 = arith.constant 0 : i32
    return %c0_i32, %c0_i32_0 : i32, i32
  }
  func.func @transform_3(%arg0: i32) -> (i32, i32) {
    %c0_i32 = arith.constant 0 : i32
    %c0_i32_0 = arith.constant 0 : i32
    %c0_i32_1 = arith.constant 0 : i32
    return %c0_i32, %c0_i32_0 : i32, i32
  }
  func.func @transform_4(%arg0: i32) -> (i32, i32) {
    %c0_i32 = arith.constant 0 : i32
    %c0_i32_0 = arith.constant 0 : i32
    %c0_i32_1 = arith.constant 0 : i32
    return %c0_i32, %c0_i32_0 : i32, i32
  }
  func.func @transform_5(%arg0: i32) -> (i32, i32) {
    %c0_i32 = arith.constant 0 : i32
    %c0_i32_0 = arith.constant 0 : i32
    return %arg0, %c0_i32 : i32, i32
  }
}

</mosaic_0001>

<llo_original>
// kernel: tpu_custom_call.1
$region0: #{tpu_custom_call.1}
  #allocation0 [shape = 'u32[]', space=smem, size = 0x4, offset = 0x4, fixed_abs, tag = 'smem constant byte address 0x4 - core index']
  #allocation1 [shape = 'u32[144,128]{1,0:T(1,128)}', space=vmem, size = 0x12000, scoped, tag = 'internal scratch']
  %s0 = inlined_call_operand.hbm [shape: f32[16,32], index: 0, kind: input, shape index: {}]
  %s1 = inlined_call_operand.hbm [shape: f32[2,8,16], index: 1, kind: input, shape index: {}]
  %s2 = inlined_call_operand.vmem [shape: s32[2,16], index: 2, kind: input, shape index: {}]
  %s3 = inlined_call_operand.hbm [shape: f32[32,256], index: 3, kind: input, shape index: {}]
  %s4 = inlined_call_operand.vmem [shape: f32[1,256], index: 4, kind: input, shape index: {}]
  %s5 = inlined_call_operand.hbm [shape: f32[16,256], index: 5, kind: output, shape index: {}]
  %s6 = sld [smem:[#allocation0]]
  $region42: #{tpu_custom_call.1} parent=0
    _
  %s8 = ssub.s32 1, %s6
  %s9 = scalar_select 0, %s8, %s6
  $region1: #{tpu_custom_call.1} parent=0
    #allocation2 [shape = 'u8[8192]{0}', space=vmem, size = 0x2000, scoped, tag = 'input window, operand 0, single buffered']
    #allocation3 [shape = 's32[1]{0}', space=sflag, size = 0x4, scoped, tag = 'scoped memory for tpu_custom_call.1']
    #allocation4 [shape = 's32[1]{0}', space=sflag, size = 0x4, scoped, tag = 'scoped memory for tpu_custom_call.1']
    #allocation5 [shape = 'u8[8192]{0}', space=vmem, size = 0x2000, scoped, tag = 'input window, operand 1, single buffered']
    #allocation6 [shape = 's32[1]{0}', space=sflag, size = 0x4, scoped, tag = 'scoped memory for tpu_custom_call.1']
    #allocation7 [shape = 'u8[32768]{0}', space=vmem, size = 0x8000, scoped, tag = 'input window, operand 3, single buffered']
    #allocation8 [shape = 'u8[16384]{0}', space=vmem, size = 0x4000, scoped, tag = 'output window, operand 0, single buffered']
    %10 = vsyncpa [#allocation3], 0
    %11 = vsyncpa [#allocation6], 0
    %12 = vsyncpa [#allocation4], 0
    // Predicated region
    $region2: #{tpu_custom_call.1} parent=1 // pred_check
      _
    $region3: #{tpu_custom_call.1} parent=1 // pred_check_branch
      %14 = sbr.rel (0) target = $region5
    $region4: #{tpu_custom_call.1} parent=1 // pred_region
      %s16 = ssub.s32 256, 256
      %17 = vsyncadd [#allocation3], %s16
      %s18 = sshll.u32 [#allocation2], 4
      %s19 = int_to_ptr.vmem [resolvable:$true] %s18
      %24 = dma.hbm_to_vmem [thread:$0]  %s0, 256, %s19, [#allocation3], 128, 128, 8
    $region5: #{tpu_custom_call.1} parent=1 // pred_fallthru
      _
    // Predicated region
    $region6: #{tpu_custom_call.1} parent=1 // pred_check
      _
    $region7: #{tpu_custom_call.1} parent=1 // pred_check_branch
      %26 = sbr.rel (0) target = $region9
    $region8: #{tpu_custom_call.1} parent=1 // pred_region
      %s28 = ssub.s32 256, 256
      %29 = vsyncadd [#allocation6], %s28
      %s30 = sshll.u32 [#allocation5], 4
      %s31 = int_to_ptr.vmem [resolvable:$true] %s30
      %36 = dma.hbm_to_vmem [thread:$0]  %s1, 256, %s31, [#allocation6], 128, 128, 8
    $region9: #{tpu_custom_call.1} parent=1 // pred_fallthru
      _
    // Predicated region
    $region10: #{tpu_custom_call.1} parent=1 // pred_check
      _
    $region11: #{tpu_custom_call.1} parent=1 // pred_check_branch
      %38 = sbr.rel (0) target = $region13
    $region12: #{tpu_custom_call.1} parent=1 // pred_region
      _
    $region13: #{tpu_custom_call.1} parent=1 // pred_fallthru
      _
    // Predicated region
    $region14: #{tpu_custom_call.1} parent=1 // pred_check
      _
    $region15: #{tpu_custom_call.1} parent=1 // pred_check_branch
      %40 = sbr.rel (0) target = $region17
    $region16: #{tpu_custom_call.1} parent=1 // pred_region
      %s42 = ssub.s32 1024, 1024
      %43 = vsyncadd [#allocation6], %s42
      %s44 = sshll.u32 [#allocation7], 4
      %s45 = int_to_ptr.vmem [resolvable:$true] %s44
      %50 = dma.hbm_to_vmem [thread:$0]  %s3, 1024, %s45, [#allocation6], 256, 256, 16
    $region17: #{tpu_custom_call.1} parent=1 // pred_fallthru
      _
    // Predicated region
    $region18: #{tpu_custom_call.1} parent=1 // pred_check
      _
    $region19: #{tpu_custom_call.1} parent=1 // pred_check_branch
      %52 = sbr.rel (0) target = $region21
    $region20: #{tpu_custom_call.1} parent=1 // pred_region
      _
    $region21: #{tpu_custom_call.1} parent=1 // pred_fallthru
      _
    // Predicated region
    $region22: #{tpu_custom_call.1} parent=1 // pred_check
      _
    $region23: #{tpu_custom_call.1} parent=1 // pred_check_branch
      %54 = sbr.rel (0) target = $region25
    $region24: #{tpu_custom_call.1} parent=1 // pred_region
      %55 = dma.done [#allocation3], 256
    $region25: #{tpu_custom_call.1} parent=1 // pred_fallthru
      _
    // Predicated region
    $region26: #{tpu_custom_call.1} parent=1 // pred_check
      _
    $region27: #{tpu_custom_call.1} parent=1 // pred_check_branch
      %57 = sbr.rel (0) target = $region29
    $region28: #{tpu_custom_call.1} parent=1 // pred_region
      %58 = dma.done [#allocation6], 256
    $region29: #{tpu_custom_call.1} parent=1 // pred_fallthru
      _
    // Predicated region
    $region30: #{tpu_custom_call.1} parent=1 // pred_check
      _
    $region31: #{tpu_custom_call.1} parent=1 // pred_check_branch
      %60 = sbr.rel (0) target = $region33
    $region32: #{tpu_custom_call.1} parent=1 // pred_region
      %61 = dma.done [#allocation6], 1024
    $region33: #{tpu_custom_call.1} parent=1 // pred_fallthru
      _
    %v62 = vld [vmem:[#allocation2] sm:$0xff]
    %v63 = vld [vmem:[#allocation2 + $0x8] sm:$0xff]
    %v64 = vld [vmem:[#allocation7] sm:$0xff]
    %v65 = vld [vmem:[#allocation7 + $0x8] sm:$0xff]
    %v66 = vld [vmem:[#allocation7 + $0x10] sm:$0xff]
    %v67 = vld [vmem:[#allocation7 + $0x18] sm:$0xff]
    %v68 = vld [vmem:[#allocation7 + $0x20] sm:$0xff]
    %v69 = vld [vmem:[#allocation7 + $0x28] sm:$0xff]
    %v70 = vld [vmem:[#allocation7 + $0x30] sm:$0xff]
    %v71 = vld [vmem:[#allocation7 + $0x38] sm:$0xff]
    %v72 = vld [vmem:[%s4] sm:$0x3]
    %v74 = vlaneseq
    %v75 = vshrl.u32 %v74, 7
    %v76 = vsub.s32 0, %v75
    %v77 = vrot.slane %v72, %v76
    %v78 = vlaneseq
    %v79 = vshrl.u32 %v78, 7
    %v80 = vsub.s32 1, %v79
    %v81 = vrot.slane %v72, %v80
    %vm84 = vcmask 261120
    %v86 = vsel %vm84, %v62, 0
    %v89 = vsel %vm84, %v63, 0
    %91 = vmatprep.subr.mxu0 %v65
    %92 = vmatpush1.msra.mxu0 %v64
    %93 = vmatprep.subr.mxu0 %v67
    %94 = vmatpush1.msra.mxu0 %v66
    %95 = vmatprep.subr.mxu0 %v69
    %96 = vmatpush1.msra.mxu0 %v68
    %97 = vmatprep.subr.mxu0 %v71
    %98 = vmatpush1.msra.mxu0 %v70
    %99 = vmatprep.subr.mxu0 0.0
    %100 = vmatpush1.msra.mxu0 0.0
    %101 = vmatprep.subr.mxu0 0.0
    %102 = vmatpush1.msra.mxu0 0.0
    %103 = vmatprep.subr.mxu0 0.0
    %104 = vmatpush1.msra.mxu0 0.0
    %105 = vmatprep.subr.mxu0 0.0
    %106 = vmatpush1.msra.mxu0 0.0
    %107 = vmatprep.subr.mxu0 0.0
    %108 = vmatpush1.msra.mxu0 0.0
    %109 = vmatprep.subr.mxu0 0.0
    %110 = vmatpush1.msra.mxu0 0.0
    %111 = vmatprep.subr.mxu0 0.0
    %112 = vmatpush1.msra.mxu0 0.0
    %113 = vmatprep.subr.mxu0 0.0
    %114 = vmatpush1.msra.mxu0 0.0
    %115 = vmatprep.subr.mxu0 0.0
    %116 = vmatpush1.msra.mxu0 0.0
    %117 = vmatprep.subr.mxu0 0.0
    %118 = vmatpush1.msra.mxu0 0.0
    %119 = vmatprep.subr.mxu0 0.0
    %120 = vmatpush1.msra.mxu0 0.0
    %121 = vmatprep.subr.mxu0 0.0
    %122 = vmatpush1.msra.mxu0 0.0
    %123 = vmatprep.subr.mxu0 0.0
    %124 = vmatpush1.msra.mxu0 0.0
    %125 = vmatprep.subr.mxu0 0.0
    %126 = vmatpush1.msra.mxu0 0.0
    %127 = vmatprep.subr.mxu0 0.0
    %128 = vmatpush1.msra.mxu0 0.0
    %129 = vmatprep.subr.mxu0 0.0
    %130 = vmatpush1.msra.mxu0 0.0
    %131 = vmatprep.subr.mxu0 0.0
    %132 = vmatpush1.msra.mxu0 0.0
    %133 = vmatprep.subr.mxu0 0.0
    %134 = vmatpush1.msra.mxu0 0.0
    %135 = vmatprep.subr.mxu0 0.0
    %136 = vmatpush1.msra.mxu0 0.0
    %137 = vmatprep.subr.mxu0 0.0
    %138 = vmatpush1.msra.mxu0 0.0
    %139 = vmatprep.subr.mxu0 0.0
    %140 = vmatpush1.msra.mxu0 0.0
    %141 = vmatprep.subr.mxu0 0.0
    %142 = vmatpush1.msra.mxu0 0.0
    %143 = vmatprep.subr.mxu0 0.0
    %144 = vmatpush1.msra.mxu0 0.0
    %145 = vmatprep.subr.mxu0 0.0
    %146 = vmatpush1.msra.mxu0 0.0
    %147 = vmatprep.subr.mxu0 0.0
    %148 = vmatpush1.msra.mxu0 0.0
    %149 = vmatprep.subr.mxu0 0.0
    %150 = vmatpush1.msra.mxu0 0.0
    %151 = vmatprep.subr.mxu0 0.0
    %152 = vmatpush1.msra.mxu0 0.0
    %153 = vmatprep.subr.mxu0 0.0
    %154 = vmatpush1.msra.mxu0 0.0
    %155 = vmatprep.mubr.f32.mxu0 0.0
    %156 = vmatmul.mubr.f32.gmra.mrb[0].mxu0 %v86
    %v157 = vpop.f32.mrb[0].mxu0
    %v158 = vadd.f32 %v77, %v157
    %v159 = vpop.f32.mrb[0].mxu0
    %v160 = vadd.f32 %v81, %v159
    %161 = vmatprep.mubr.f32.mxu0 0.0
    %162 = vmatmul.mubr.f32.gmra.mrb[0].mxu0 %v89
    %v163 = vpop.f32.mrb[0].mxu0
    %v164 = vadd.f32 %v77, %v163
    %v165 = vpop.f32.mrb[0].mxu0
    %v166 = vadd.f32 %v81, %v165
    %167 = vdwg.mxu0
    %v168 = vxor.u32 %v160, 2147483648
    %v169 = vxor.u32 %v166, 2147483648
    %v170 = vmul.f32 %v168, 1.442695
    %v171 = vpow.pop %v170
    %v172 = vmul.f32 %v169, 1.442695
    %v173 = vpow.pop %v172
    %v174 = vadd.f32 %v171, 1.0
    %v175 = vadd.f32 %v173, 1.0
    %v176 = vrcp.pop %v174
    %v177 = vmul.f32 1.0, %v176
    %v178 = vrcp.pop %v175
    %v179 = vmul.f32 1.0, %v178
    %180 = vmax.xlane.f32.xlu0 %v158
    %v181 = vpop.xlane.xlu0 %180
    %182 = vmax.xlane.f32.xlu0 %v164
    %v183 = vpop.xlane.xlu0 %182
    %v184 = vsub.f32 %v158, %v181
    %v185 = vsub.f32 %v164, %v183
    %v186 = vmul.f32 %v184, 1.442695
    %v187 = vpow.pop %v186
    %v188 = vmul.f32 %v185, 1.442695
    %v189 = vpow.pop %v188
    %191 = vset.pattern.permute.xlu0 0
    %192 = vperm.xlu0 %191, %v177
    %v193 = vpop.permute.xlu0 %192
    %196 = vset.pattern.permute.xlu0 0
    %197 = vperm.xlu0 %196, %v179
    %v198 = vpop.permute.xlu0 %197
    %v200 = vmul.f32 %v193, %v187
    %v201 = vmul.f32 %v198, %v189
    %202 = vadd.xlane.f32.xlu0 %v187
    %v203 = vpop.xlane.xlu0 %202
    %204 = vadd.xlane.f32.xlu0 %v189
    %v205 = vpop.xlane.xlu0 %204
    %v206 = vrcp.pop %v203
    %v207 = vrcp.pop %v205
    %v208 = vmul.f32 %v200, %v206
    %v209 = vmul.f32 %v201, %v207
    %v210 = vld [vmem:[#allocation5] sm:$0xff]
    %v211 = vld [vmem:[#allocation5 + $0x8] sm:$0xff]
    %vm212 = vcmask 130048
    %v213 = vsel %vm212, %v210, -inf
    %214 = vmax.xlane.f32.xlu0 %v213
    %v215 = vpop.xlane.xlu0 %214
    %v216 = vsel %vm212, %v211, -inf
    %217 = vmax.xlane.f32.xlu0 %v216
    %v218 = vpop.xlane.xlu0 %217
    %v219 = vsub.f32 %v210, %v215
    %v220 = vsub.f32 %v211, %v218
    %v221 = vmul.f32 %v219, 1.442695
    %v222 = vpow.pop %v221
    %v223 = vmul.f32 %v220, 1.442695
    %v224 = vpow.pop %v223
    %v225 = vsel %vm212, %v222, 0.0
    %226 = vadd.xlane.f32.xlu0 %v225
    %v227 = vpop.xlane.xlu0 %226
    %v228 = vsel %vm212, %v224, 0.0
    %229 = vadd.xlane.f32.xlu0 %v228
    %v230 = vpop.xlane.xlu0 %229
    %v231 = vrcp.pop %v227
    %v232 = vrcp.pop %v230
    %v233 = vmul.f32 %v222, %v231
    %v234 = vmul.f32 %v224, %v232
    %s235 = smul.u32 0, 2
    %s236 = scalar_lea.vmem %s2, %s235
    %v237 = vld [vmem:[%s236] sm:$0x3]
    %v238 = vlaneseq
    %v239 = vand.u32 %v238, 127
    %v240 = vadd.s32 %v239, 128
    %v241 = vlaneseq
    %v242 = vshrl.u32 %v241, 7
    %v243 = vsub.s32 0, %v242
    %v244 = vrot.slane %v237, %v243
    %246 = vbcast.lane.b32.xlu0 %v244, 256
    %v247 = vpop.permute.xlu0 %246
    %s249 = sor.u32 256, 8
    %250 = vbcast.lane.b32.xlu0 %v244, %s249
    %v251 = vpop.permute.xlu0 %250
    %v252 = vlaneseq
    %v253 = vshrl.u32 %v252, 7
    %v254 = vsub.s32 1, %v253
    %v255 = vrot.slane %v237, %v254
    %257 = vbcast.lane.b32.xlu0 %v255, 256
    %v258 = vpop.permute.xlu0 %257
    %s260 = sor.u32 256, 8
    %261 = vbcast.lane.b32.xlu0 %v255, %s260
    %v262 = vpop.permute.xlu0 %261
    %vm263 = vcmp.eq.s32.totalorder %v239, %v247
    %vm264 = vcmp.eq.s32.totalorder %v240, %v247
    %vm265 = vcmp.eq.s32.totalorder %v239, %v251
    %vm266 = vcmp.eq.s32.totalorder %v240, %v251
    %vm267 = vcmp.eq.s32.totalorder %v239, %v258
    %vm268 = vcmp.eq.s32.totalorder %v240, %v258
    %vm269 = vcmp.eq.s32.totalorder %v239, %v262
    %vm270 = vcmp.eq.s32.totalorder %v240, %v262
    %v271 = vsel %vm263, 1, 0
    %v272 = vsel %vm264, 1, 0
    %v273 = vsel %vm265, 1, 0
    %v274 = vsel %vm266, 1, 0
    %v275 = vsel %vm267, 1, 0
    %v276 = vsel %vm268, 1, 0
    %v277 = vsel %vm269, 1, 0
    %v278 = vsel %vm270, 1, 0
    %v279 = vcvt.s32.f32 %v271
    %v280 = vcvt.s32.f32 %v272
    %v281 = vcvt.s32.f32 %v273
    %v282 = vcvt.s32.f32 %v274
    %v283 = vcvt.s32.f32 %v275
    %v284 = vcvt.s32.f32 %v276
    %v285 = vcvt.s32.f32 %v277
    %v286 = vcvt.s32.f32 %v278
    %v288 = vsel %vm212, %v233, 0
    %290 = vmatprep.subr.mxu0 %v280
    %291 = vmatpush1.msra.mxu0 %v279
    %292 = vmatprep.subr.mxu0 %v282
    %293 = vmatpush1.msra.mxu0 %v281
    %294 = vmatprep.subr.mxu0 0.0
    %295 = vmatpush1.msra.mxu0 0.0
    %296 = vmatprep.subr.mxu0 0.0
    %297 = vmatpush1.msra.mxu0 0.0
    %298 = vmatprep.subr.mxu0 0.0
    %299 = vmatpush1.msra.mxu0 0.0
    %300 = vmatprep.subr.mxu0 0.0
    %301 = vmatpush1.msra.mxu0 0.0
    %302 = vmatprep.subr.mxu0 0.0
    %303 = vmatpush1.msra.mxu0 0.0
    %304 = vmatprep.subr.mxu0 0.0
    %305 = vmatpush1.msra.mxu0 0.0
    %306 = vmatprep.subr.mxu0 0.0
    %307 = vmatpush1.msra.mxu0 0.0
    %308 = vmatprep.subr.mxu0 0.0
    %309 = vmatpush1.msra.mxu0 0.0
    %310 = vmatprep.subr.mxu0 0.0
    %311 = vmatpush1.msra.mxu0 0.0
    %312 = vmatprep.subr.mxu0 0.0
    %313 = vmatpush1.msra.mxu0 0.0
    %314 = vmatprep.subr.mxu0 0.0
    %315 = vmatpush1.msra.mxu0 0.0
    %316 = vmatprep.subr.mxu0 0.0
    %317 = vmatpush1.msra.mxu0 0.0
    %318 = vmatprep.subr.mxu0 0.0
    %319 = vmatpush1.msra.mxu0 0.0
    %320 = vmatprep.subr.mxu0 0.0
    %321 = vmatpush1.msra.mxu0 0.0
    %322 = vmatprep.subr.mxu0 0.0
    %323 = vmatpush1.msra.mxu0 0.0
    %324 = vmatprep.subr.mxu0 0.0
    %325 = vmatpush1.msra.mxu0 0.0
    %326 = vmatprep.subr.mxu0 0.0
    %327 = vmatpush1.msra.mxu0 0.0
    %328 = vmatprep.subr.mxu0 0.0
    %329 = vmatpush1.msra.mxu0 0.0
    %330 = vmatprep.subr.mxu0 0.0
    %331 = vmatpush1.msra.mxu0 0.0
    %332 = vmatprep.subr.mxu0 0.0
    %333 = vmatpush1.msra.mxu0 0.0
    %334 = vmatprep.subr.mxu0 0.0
    %335 = vmatpush1.msra.mxu0 0.0
    %336 = vmatprep.subr.mxu0 0.0
    %337 = vmatpush1.msra.mxu0 0.0
    %338 = vmatprep.subr.mxu0 0.0
    %339 = vmatpush1.msra.mxu0 0.0
    %340 = vmatprep.subr.mxu0 0.0
    %341 = vmatpush1.msra.mxu0 0.0
    %342 = vmatprep.subr.mxu0 0.0
    %343 = vmatpush1.msra.mxu0 0.0
    %344 = vmatprep.subr.mxu0 0.0
    %345 = vmatpush1.msra.mxu0 0.0
    %346 = vmatprep.subr.mxu0 0.0
    %347 = vmatpush1.msra.mxu0 0.0
    %348 = vmatprep.subr.mxu0 0.0
    %349 = vmatpush1.msra.mxu0 0.0
    %350 = vmatprep.subr.mxu0 0.0
    %351 = vmatpush1.msra.mxu0 0.0
    %352 = vmatprep.subr.mxu0 0.0
    %353 = vmatpush1.msra.mxu0 0.0
    %354 = vmatprep.mubr.f32.mxu0 0.0
    %355 = vmatmul.mubr.f32.gmra.mrb[0].mxu0 %v288
    %v356 = vpop.f32.mrb[0].mxu0
    %v357 = vadd.f32 0.0, %v356
    %v358 = vpop.f32.mrb[0].mxu0
    %v359 = vadd.f32 0.0, %v358
    %360 = vdwg.mxu0
    %v362 = vsel %vm212, %v234, 0
    %364 = vmatprep.subr.mxu0 %v284
    %365 = vmatpush1.msra.mxu0 %v283
    %366 = vmatprep.subr.mxu0 %v286
    %367 = vmatpush1.msra.mxu0 %v285
    %368 = vmatprep.subr.mxu0 0.0
    %369 = vmatpush1.msra.mxu0 0.0
    %370 = vmatprep.subr.mxu0 0.0
    %371 = vmatpush1.msra.mxu0 0.0
    %372 = vmatprep.subr.mxu0 0.0
    %373 = vmatpush1.msra.mxu0 0.0
    %374 = vmatprep.subr.mxu0 0.0
    %375 = vmatpush1.msra.mxu0 0.0
    %376 = vmatprep.subr.mxu0 0.0
    %377 = vmatpush1.msra.mxu0 0.0
    %378 = vmatprep.subr.mxu0 0.0
    %379 = vmatpush1.msra.mxu0 0.0
    %380 = vmatprep.subr.mxu0 0.0
    %381 = vmatpush1.msra.mxu0 0.0
    %382 = vmatprep.subr.mxu0 0.0
    %383 = vmatpush1.msra.mxu0 0.0
    %384 = vmatprep.subr.mxu0 0.0
    %385 = vmatpush1.msra.mxu0 0.0
    %386 = vmatprep.subr.mxu0 0.0
    %387 = vmatpush1.msra.mxu0 0.0
    %388 = vmatprep.subr.mxu0 0.0
    %389 = vmatpush1.msra.mxu0 0.0
    %390 = vmatprep.subr.mxu0 0.0
    %391 = vmatpush1.msra.mxu0 0.0
    %392 = vmatprep.subr.mxu0 0.0
    %393 = vmatpush1.msra.mxu0 0.0
    %394 = vmatprep.subr.mxu0 0.0
    %395 = vmatpush1.msra.mxu0 0.0
    %396 = vmatprep.subr.mxu0 0.0
    %397 = vmatpush1.msra.mxu0 0.0
    %398 = vmatprep.subr.mxu0 0.0
    %399 = vmatpush1.msra.mxu0 0.0
    %400 = vmatprep.subr.mxu0 0.0
    %401 = vmatpush1.msra.mxu0 0.0
    %402 = vmatprep.subr.mxu0 0.0
    %403 = vmatpush1.msra.mxu0 0.0
    %404 = vmatprep.subr.mxu0 0.0
    %405 = vmatpush1.msra.mxu0 0.0
    %406 = vmatprep.subr.mxu0 0.0
    %407 = vmatpush1.msra.mxu0 0.0
    %408 = vmatprep.subr.mxu0 0.0
    %409 = vmatpush1.msra.mxu0 0.0
    %410 = vmatprep.subr.mxu0 0.0
    %411 = vmatpush1.msra.mxu0 0.0
    %412 = vmatprep.subr.mxu0 0.0
    %413 = vmatpush1.msra.mxu0 0.0
    %414 = vmatprep.subr.mxu0 0.0
    %415 = vmatpush1.msra.mxu0 0.0
    %416 = vmatprep.subr.mxu0 0.0
    %417 = vmatpush1.msra.mxu0 0.0
    %418 = vmatprep.subr.mxu0 0.0
    %419 = vmatpush1.msra.mxu0 0.0
    %420 = vmatprep.subr.mxu0 0.0
    %421 = vmatpush1.msra.mxu0 0.0
    %422 = vmatprep.subr.mxu0 0.0
    %423 = vmatpush1.msra.mxu0 0.0
    %424 = vmatprep.subr.mxu0 0.0
    %425 = vmatpush1.msra.mxu0 0.0
    %426 = vmatprep.subr.mxu0 0.0
    %427 = vmatpush1.msra.mxu0 0.0
    %428 = vmatprep.mubr.f32.mxu0 0.0
    %429 = vmatmul.mubr.f32.gmra.mrb[0].mxu0 %v362
    %v430 = vpop.f32.mrb[0].mxu0
    %v431 = vadd.f32 0.0, %v430
    %v432 = vpop.f32.mrb[0].mxu0
    %v433 = vadd.f32 0.0, %v432
    %434 = vdwg.mxu0
    %v435 = vsub.f32 1.0, %v177
    %v436 = vsub.f32 1.0, %v179
    %438 = vset.pattern.permute.xlu0 0
    %439 = vperm.xlu0 %438, %v435
    %v440 = vpop.permute.xlu0 %439
    %443 = vset.pattern.permute.xlu0 0
    %444 = vperm.xlu0 %443, %v436
    %v445 = vpop.permute.xlu0 %444
    %v447 = vmul.f32 %v440, %v357
    %v448 = vmul.f32 %v440, %v359
    %v449 = vmul.f32 %v445, %v431
    %v450 = vmul.f32 %v445, %v433
    %v451 = vadd.f32 %v208, %v447
    %v452 = vadd.f32 %v448, 0.0
    %v453 = vadd.f32 %v209, %v449
    %v454 = vadd.f32 %v450, 0.0
    %v455 = vadd.f32 %v451, 1e-18
    %v456 = vadd.f32 %v452, 1e-18
    %v457 = vadd.f32 %v453, 1e-18
    %v458 = vadd.f32 %v454, 1e-18
    %v459 = vlog2.pop %v455
    %v460 = vmul.f32 %v459, 0.6931472
    %v461 = vlog2.pop %v456
    %v462 = vmul.f32 %v461, 0.6931472
    %v463 = vlog2.pop %v457
    %v464 = vmul.f32 %v463, 0.6931472
    %v465 = vlog2.pop %v458
    %v466 = vmul.f32 %v465, 0.6931472
    %467 = vst [vmem:[#allocation8] sm:$0xff] %v460
    %468 = vst [vmem:[#allocation8 + $0x8] sm:$0xff] %v462
    %469 = vst [vmem:[#allocation8 + $0x10] sm:$0xff] %v464
    %470 = vst [vmem:[#allocation8 + $0x18] sm:$0xff] %v466
    // Predicated region
    $region34: #{tpu_custom_call.1} parent=1 // pred_check
      _
    $region35: #{tpu_custom_call.1} parent=1 // pred_check_branch
      %472 = sbr.rel (0) target = $region37
    $region36: #{tpu_custom_call.1} parent=1 // pred_region
      %s474 = ssub.s32 512, 512
      %475 = vsyncadd [#allocation4], %s474
      %s476 = sshll.u32 [#allocation8], 4
      %s477 = int_to_ptr.vmem [resolvable:$true] %s476
      %482 = dma.vmem_to_hbm [thread:$0]  %s477, 512, %s5, [#allocation4], 256, 256, 16
    $region37: #{tpu_custom_call.1} parent=1 // pred_fallthru
      _
    // Predicated region
    $region38: #{tpu_custom_call.1} parent=1 // pred_check
      _
    $region39: #{tpu_custom_call.1} parent=1 // pred_check_branch
      %484 = sbr.rel (0) target = $region41
    $region40: #{tpu_custom_call.1} parent=1 // pred_region
      %485 = dma.done [#allocation4], 512
    $region41: #{tpu_custom_call.1} parent=1 // pred_fallthru
      _
    %486 = vsyncpa [#allocation3], 1
    %487 = vsyncpa [#allocation6], 1
    %488 = vsyncpa [#allocation4], 1

</llo_original>
